<compile_context>
chip_gen: v6e
topology: v6e:2x2x1
jax: 0.10.0
libtpu: 0.0.40
codegen_flags: <defaults>
</compile_context>

<pallas_src>
import functools

import jax
import jax.numpy as jnp
from jax.experimental import pallas as pl
from jax.experimental.pallas import tpu as pltpu

_NEG = -1e30  # finite "minus infinity" padding; keeps logsumexp NaN-free.


def _round_up(x, m):
    return ((x + m - 1) // m) * m


def _quatre_ce_kernel(l1_ref, t1_ref, l2_ref, t2_ref, l3_ref, t3_ref,
                      l4_ref, t4_ref, out_ref, *, weights, batch, tile_b):
    """One batch tile of all four cross-entropy heads.

    l*_ref : (TB, Cp_h) logits (native dtype), class axis padded to 128 lanes
    t*_ref : (TB, 1) int32 targets
    out_ref: (1, 8, 128) f32 lane-dense partial output; value lives at [0,0,0]
    """
    row_start = pl.program_id(0) * tile_b
    row_ids = jax.lax.broadcasted_iota(jnp.int32, (tile_b, 1), 0) + row_start
    row_mask = row_ids < batch  # mask out batch-padding rows

    def head_nll_sum(logits_ref, tgt_ref):
        logits = logits_ref[...].astype(jnp.float32)          # (TB, Cp)
        tgt = tgt_ref[...]                                     # (TB, 1) int32
        # Numerically stable logsumexp. Padded lanes are -1e30 -> exp -> 0.
        m = jnp.max(logits, axis=-1, keepdims=True)            # (TB, 1)
        lse = jnp.log(jnp.sum(jnp.exp(logits - m), axis=-1, keepdims=True)) + m
        # Gather the target logit via a lane-iota one-hot (padded class ids
        # can never equal a valid target < C).
        cls = jax.lax.broadcasted_iota(jnp.int32, logits.shape, 1)
        onehot = (cls == tgt).astype(jnp.float32)
        picked = jnp.sum(onehot * logits, axis=-1, keepdims=True)
        nll = jnp.where(row_mask, lse - picked, 0.0)            # (TB, 1)
        return jnp.sum(nll)

    inv_b = 1.0 / batch
    total = (weights[0] * head_nll_sum(l1_ref, t1_ref)
             + weights[1] * head_nll_sum(l2_ref, t2_ref)
             + weights[2] * head_nll_sum(l3_ref, t3_ref)
             + weights[3] * head_nll_sum(l4_ref, t4_ref)) * inv_b

    # Lane-dense (8,128) output tile; the weighted partial sum sits at [0,0].
    sub = jax.lax.broadcasted_iota(jnp.int32, (1, 8, 128), 1)
    lane = jax.lax.broadcasted_iota(jnp.int32, (1, 8, 128), 2)
    out_ref[...] = jnp.where((sub == 0) & (lane == 0), total, 0.0)


@functools.partial(jax.jit, static_argnames=("weights", "tile_b"))
def _quatre_cross_entropy(p1, p2, p3, p4, t1, t2, t3, t4, *, weights, tile_b):
    B = p1.shape[0]

    # Batch tile: multiple of 8 sublanes, capped so VMEM stays bounded.
    TB = _round_up(min(tile_b, _round_up(B, 8)), 8)
    B_pad = _round_up(B, TB)
    grid = B_pad // TB

    def prep(logits, targets):
        _, C = logits.shape
        C_pad = _round_up(C, 128)
        lg = jnp.pad(logits,
                     ((0, B_pad - B), (0, C_pad - C)),
                     constant_values=_NEG)
        tg = jnp.pad(targets.astype(jnp.int32), ((0, B_pad - B),),
                     constant_values=0).reshape(B_pad, 1)
        return lg, tg

    l1, g1 = prep(p1, t1)
    l2, g2 = prep(p2, t2)
    l3, g3 = prep(p3, t3)
    l4, g4 = prep(p4, t4)

    in_specs = []
    for lg in (l1, l2, l3, l4):
        c_pad = lg.shape[1]
        in_specs.append(pl.BlockSpec((TB, c_pad), lambda i: (i, 0)))
        in_specs.append(pl.BlockSpec((TB, 1), lambda i: (i, 0)))

    kernel = functools.partial(_quatre_ce_kernel,
                               weights=weights, batch=B, tile_b=TB)

    out = pl.pallas_call(
        kernel,
        out_shape=jax.ShapeDtypeStruct((grid, 8, 128), jnp.float32),
        grid=(grid,),
        in_specs=in_specs,
        out_specs=pl.BlockSpec((1, 8, 128), lambda i: (i, 0, 0)),
        compiler_params=pltpu.CompilerParams(
            dimension_semantics=("parallel",)),
    )(l1, g1, l2, g2, l3, g3, l4, g4)

    # Only element [i, 0, 0] of each tile is non-zero -> a plain sum finishes
    # the mean + weighted combination already applied inside the kernel.
    return jnp.sum(out)


class QuatreCrossEntropyPallas:
    """JAX/Pallas port of QuatreCrossEntropy (fused four-head CE)."""

    def __init__(self, weights=(2.0, 1.0, 1.0, 0.4), tile_b=512):
        w = [float(v) for v in weights]
        s = sum(w)
        self.weights = tuple(v / s for v in w)   # static Python floats
        self.tile_b = int(tile_b)

    def __call__(self, y_pred, y_true):
        p1, p2, p3, p4 = y_pred
        return _quatre_cross_entropy(
            p1, p2, p3, p4,
            y_true["grapheme_root"], y_true["vowel_diacritic"],
            y_true["consonant_diacritic"], y_true["grapheme"],
            weights=self.weights, tile_b=self.tile_b)


def _ce_reference(logits, targets):
    """Plain-JAX reference matching F.cross_entropy(reduction='mean')."""
    logp = jax.nn.log_softmax(logits.astype(jnp.float32), axis=-1)
    picked = jnp.take_along_axis(logp, targets[:, None].astype(jnp.int32),
                                 axis=-1)
    return -jnp.mean(picked)


def _run_case(key, B, num_classes, dtype):
    keys = jax.random.split(key, 2 * len(num_classes))
    y_pred, tgts = [], []
    for h, C in enumerate(num_classes):
        logits = jax.random.normal(keys[2 * h], (B, C), dtype=jnp.float32)
        tgt = jax.random.randint(keys[2 * h + 1], (B,), 0, C, dtype=jnp.int32)
        y_pred.append(logits.astype(dtype))
        tgts.append(tgt)
    y_true = {
        "grapheme_root": tgts[0],
        "vowel_diacritic": tgts[1],
        "consonant_diacritic": tgts[2],
        "grapheme": tgts[3],
    }
    loss_fn = QuatreCrossEntropyPallas(weights=[2.0, 1.0, 1.0, 0.4])
    loss = jax.block_until_ready(loss_fn(y_pred, y_true))

    w = jnp.asarray([2.0, 1.0, 1.0, 0.4], dtype=jnp.float32)
    w = w / jnp.sum(w)
    ref = sum(w[i] * _ce_reference(y_pred[i], tgts[i]) for i in range(4))
    return loss, ref


if __name__ == "__main__":
    key = jax.random.PRNGKey(0)
    k1, k2 = jax.random.split(key)

    # Four heads (grapheme_root, vowel_diacritic, consonant_diacritic, grapheme)
    num_classes = [40, 16, 8, 64]

    # Case 1: f32 logits, batch multiple of 8.
    loss, ref = _run_case(k1, B=8, num_classes=num_classes, dtype=jnp.float32)
    assert jnp.allclose(loss, ref, atol=1e-5, rtol=1e-5), (loss, ref)

    # Case 2: bf16 logits (native-dtype DMA) and a ragged batch (row masking).
    loss_bf16, ref_bf16 = _run_case(k2, B=10, num_classes=num_classes,
                                    dtype=jnp.bfloat16)
    assert jnp.allclose(loss_bf16, ref_bf16, atol=1e-4, rtol=1e-4), (
        loss_bf16, ref_bf16)

    print("KERNEL_OK")
</pallas_src>

<mosaic_0001>
module attributes {stable_mosaic.version = 11 : i64} {
  func.func @_quatre_ce_kernel(%arg0: i32, %arg1: memref<8x128xf32, #tpu.memory_space<vmem>>, %arg2: memref<8x1xi32, #tpu.memory_space<vmem>>, %arg3: memref<8x128xf32, #tpu.memory_space<vmem>>, %arg4: memref<8x1xi32, #tpu.memory_space<vmem>>, %arg5: memref<8x128xf32, #tpu.memory_space<vmem>>, %arg6: memref<8x1xi32, #tpu.memory_space<vmem>>, %arg7: memref<8x128xf32, #tpu.memory_space<vmem>>, %arg8: memref<8x1xi32, #tpu.memory_space<vmem>>, %arg9: memref<1x8x128xf32, #tpu.memory_space<vmem>>) attributes {dimension_semantics = [#tpu.dimension_semantics<parallel>], iteration_bounds = array<i64: 1>, scalar_prefetch = 0 : i64, scratch_operands = 0 : i64, tpu.core_type = #tpu.core_type<tc>, window_params = [{transform_indices = @transform_0, window_bounds = array<i64: 8, 128>}, {transform_indices = @transform_1, window_bounds = array<i64: 8, 1>}, {transform_indices = @transform_2, window_bounds = array<i64: 8, 128>}, {transform_indices = @transform_3, window_bounds = array<i64: 8, 1>}, {transform_indices = @transform_4, window_bounds = array<i64: 8, 128>}, {transform_indices = @transform_5, window_bounds = array<i64: 8, 1>}, {transform_indices = @transform_6, window_bounds = array<i64: 8, 128>}, {transform_indices = @transform_7, window_bounds = array<i64: 8, 1>}, {transform_indices = @transform_8, window_bounds = array<i64: 1, 8, 128>}]} {
    %c8_i32 = arith.constant 8 : i32
    %0 = arith.muli %arg0, %c8_i32 : i32
    %1 = tpu.iota {dimensions = array<i32: 0>} : vector<8x1xi32>
    %2 = vector.broadcast %0 : i32 to vector<8x1xi32>
    %3 = arith.addi %1, %2 : vector<8x1xi32>
    %c8_i32_0 = arith.constant 8 : i32
    %4 = vector.broadcast %c8_i32_0 : i32 to vector<8x1xi32>
    %5 = arith.cmpi slt, %3, %4 : vector<8x1xi32>
    %c0 = arith.constant 0 : index
    %c0_1 = arith.constant 0 : index
    %6 = vector.load %arg1[%c0, %c0_1] : memref<8x128xf32, #tpu.memory_space<vmem>>, vector<8x128xf32>
    %c0_2 = arith.constant 0 : index
    %c0_3 = arith.constant 0 : index
    %7 = vector.load %arg2[%c0_2, %c0_3] : memref<8x1xi32, #tpu.memory_space<vmem>>, vector<8x1xi32>
    %cst = arith.constant dense<0xFF800000> : vector<8xf32>
    %8 = vector.multi_reduction <maximumf>, %6, %cst [1] : vector<8x128xf32> to vector<8xf32>
    %9 = vector.shape_cast %8 : vector<8xf32> to vector<8x1xf32>
    %10 = vector.broadcast %9 : vector<8x1xf32> to vector<8x128xf32>
    %11 = arith.subf %6, %10 : vector<8x128xf32>
    %12 = math.exp %11 : vector<8x128xf32>
    %cst_4 = arith.constant dense<0.000000e+00> : vector<8xf32>
    %13 = vector.multi_reduction <add>, %12, %cst_4 [1] : vector<8x128xf32> to vector<8xf32>
    %14 = vector.shape_cast %13 : vector<8xf32> to vector<8x1xf32>
    %15 = math.log %14 : vector<8x1xf32>
    %16 = arith.addf %15, %9 : vector<8x1xf32>
    %17 = tpu.iota {dimensions = array<i32: 1>} : vector<8x128xi32>
    %18 = vector.broadcast %7 : vector<8x1xi32> to vector<8x128xi32>
    %19 = arith.cmpi eq, %17, %18 : vector<8x128xi32>
    %20 = arith.extui %19 : vector<8x128xi1> to vector<8x128xi32>
    %21 = arith.sitofp %20 : vector<8x128xi32> to vector<8x128xf32>
    %22 = arith.mulf %21, %6 : vector<8x128xf32>
    %cst_5 = arith.constant dense<0.000000e+00> : vector<8xf32>
    %23 = vector.multi_reduction <add>, %22, %cst_5 [1] : vector<8x128xf32> to vector<8xf32>
    %24 = vector.shape_cast %23 : vector<8xf32> to vector<8x1xf32>
    %25 = arith.subf %16, %24 : vector<8x1xf32>
    %cst_6 = arith.constant 0.000000e+00 : f32
    %26 = vector.broadcast %cst_6 : f32 to vector<8x1xf32>
    %27 = arith.select %5, %25, %26 : vector<8x1xi1>, vector<8x1xf32>
    %28 = vector.shape_cast %27 : vector<8x1xf32> to vector<1x8x1xf32>
    %cst_7 = arith.constant dense<0.000000e+00> : vector<1xf32>
    %29 = vector.multi_reduction <add>, %28, %cst_7 [1, 2] : vector<1x8x1xf32> to vector<1xf32>
    %30 = vector.shape_cast %29 : vector<1xf32> to vector<1x1x1xf32>
    %31 = vector.extract %30[0, 0, 0] : f32 from vector<1x1x1xf32>
    %cst_8 = arith.constant 0.454545468 : f32
    %32 = arith.mulf %cst_8, %31 : f32
    %c0_9 = arith.constant 0 : index
    %c0_10 = arith.constant 0 : index
    %33 = vector.load %arg3[%c0_9, %c0_10] : memref<8x128xf32, #tpu.memory_space<vmem>>, vector<8x128xf32>
    %c0_11 = arith.constant 0 : index
    %c0_12 = arith.constant 0 : index
    %34 = vector.load %arg4[%c0_11, %c0_12] : memref<8x1xi32, #tpu.memory_space<vmem>>, vector<8x1xi32>
    %cst_13 = arith.constant dense<0xFF800000> : vector<8xf32>
    %35 = vector.multi_reduction <maximumf>, %33, %cst_13 [1] : vector<8x128xf32> to vector<8xf32>
    %36 = vector.shape_cast %35 : vector<8xf32> to vector<8x1xf32>
    %37 = vector.broadcast %36 : vector<8x1xf32> to vector<8x128xf32>
    %38 = arith.subf %33, %37 : vector<8x128xf32>
    %39 = math.exp %38 : vector<8x128xf32>
    %cst_14 = arith.constant dense<0.000000e+00> : vector<8xf32>
    %40 = vector.multi_reduction <add>, %39, %cst_14 [1] : vector<8x128xf32> to vector<8xf32>
    %41 = vector.shape_cast %40 : vector<8xf32> to vector<8x1xf32>
    %42 = math.log %41 : vector<8x1xf32>
    %43 = arith.addf %42, %36 : vector<8x1xf32>
    %44 = tpu.iota {dimensions = array<i32: 1>} : vector<8x128xi32>
    %45 = vector.broadcast %34 : vector<8x1xi32> to vector<8x128xi32>
    %46 = arith.cmpi eq, %44, %45 : vector<8x128xi32>
    %47 = arith.extui %46 : vector<8x128xi1> to vector<8x128xi32>
    %48 = arith.sitofp %47 : vector<8x128xi32> to vector<8x128xf32>
    %49 = arith.mulf %48, %33 : vector<8x128xf32>
    %cst_15 = arith.constant dense<0.000000e+00> : vector<8xf32>
    %50 = vector.multi_reduction <add>, %49, %cst_15 [1] : vector<8x128xf32> to vector<8xf32>
    %51 = vector.shape_cast %50 : vector<8xf32> to vector<8x1xf32>
    %52 = arith.subf %43, %51 : vector<8x1xf32>
    %cst_16 = arith.constant 0.000000e+00 : f32
    %53 = vector.broadcast %cst_16 : f32 to vector<8x1xf32>
    %54 = arith.select %5, %52, %53 : vector<8x1xi1>, vector<8x1xf32>
    %55 = vector.shape_cast %54 : vector<8x1xf32> to vector<1x8x1xf32>
    %cst_17 = arith.constant dense<0.000000e+00> : vector<1xf32>
    %56 = vector.multi_reduction <add>, %55, %cst_17 [1, 2] : vector<1x8x1xf32> to vector<1xf32>
    %57 = vector.shape_cast %56 : vector<1xf32> to vector<1x1x1xf32>
    %58 = vector.extract %57[0, 0, 0] : f32 from vector<1x1x1xf32>
    %cst_18 = arith.constant 0.227272734 : f32
    %59 = arith.mulf %cst_18, %58 : f32
    %60 = arith.addf %32, %59 : f32
    %c0_19 = arith.constant 0 : index
    %c0_20 = arith.constant 0 : index
    %61 = vector.load %arg5[%c0_19, %c0_20] : memref<8x128xf32, #tpu.memory_space<vmem>>, vector<8x128xf32>
    %c0_21 = arith.constant 0 : index
    %c0_22 = arith.constant 0 : index
    %62 = vector.load %arg6[%c0_21, %c0_22] : memref<8x1xi32, #tpu.memory_space<vmem>>, vector<8x1xi32>
    %cst_23 = arith.constant dense<0xFF800000> : vector<8xf32>
    %63 = vector.multi_reduction <maximumf>, %61, %cst_23 [1] : vector<8x128xf32> to vector<8xf32>
    %64 = vector.shape_cast %63 : vector<8xf32> to vector<8x1xf32>
    %65 = vector.broadcast %64 : vector<8x1xf32> to vector<8x128xf32>
    %66 = arith.subf %61, %65 : vector<8x128xf32>
    %67 = math.exp %66 : vector<8x128xf32>
    %cst_24 = arith.constant dense<0.000000e+00> : vector<8xf32>
    %68 = vector.multi_reduction <add>, %67, %cst_24 [1] : vector<8x128xf32> to vector<8xf32>
    %69 = vector.shape_cast %68 : vector<8xf32> to vector<8x1xf32>
    %70 = math.log %69 : vector<8x1xf32>
    %71 = arith.addf %70, %64 : vector<8x1xf32>
    %72 = tpu.iota {dimensions = array<i32: 1>} : vector<8x128xi32>
    %73 = vector.broadcast %62 : vector<8x1xi32> to vector<8x128xi32>
    %74 = arith.cmpi eq, %72, %73 : vector<8x128xi32>
    %75 = arith.extui %74 : vector<8x128xi1> to vector<8x128xi32>
    %76 = arith.sitofp %75 : vector<8x128xi32> to vector<8x128xf32>
    %77 = arith.mulf %76, %61 : vector<8x128xf32>
    %cst_25 = arith.constant dense<0.000000e+00> : vector<8xf32>
    %78 = vector.multi_reduction <add>, %77, %cst_25 [1] : vector<8x128xf32> to vector<8xf32>
    %79 = vector.shape_cast %78 : vector<8xf32> to vector<8x1xf32>
    %80 = arith.subf %71, %79 : vector<8x1xf32>
    %cst_26 = arith.constant 0.000000e+00 : f32
    %81 = vector.broadcast %cst_26 : f32 to vector<8x1xf32>
    %82 = arith.select %5, %80, %81 : vector<8x1xi1>, vector<8x1xf32>
    %83 = vector.shape_cast %82 : vector<8x1xf32> to vector<1x8x1xf32>
    %cst_27 = arith.constant dense<0.000000e+00> : vector<1xf32>
    %84 = vector.multi_reduction <add>, %83, %cst_27 [1, 2] : vector<1x8x1xf32> to vector<1xf32>
    %85 = vector.shape_cast %84 : vector<1xf32> to vector<1x1x1xf32>
    %86 = vector.extract %85[0, 0, 0] : f32 from vector<1x1x1xf32>
    %cst_28 = arith.constant 0.227272734 : f32
    %87 = arith.mulf %cst_28, %86 : f32
    %88 = arith.addf %60, %87 : f32
    %c0_29 = arith.constant 0 : index
    %c0_30 = arith.constant 0 : index
    %89 = vector.load %arg7[%c0_29, %c0_30] : memref<8x128xf32, #tpu.memory_space<vmem>>, vector<8x128xf32>
    %c0_31 = arith.constant 0 : index
    %c0_32 = arith.constant 0 : index
    %90 = vector.load %arg8[%c0_31, %c0_32] : memref<8x1xi32, #tpu.memory_space<vmem>>, vector<8x1xi32>
    %cst_33 = arith.constant dense<0xFF800000> : vector<8xf32>
    %91 = vector.multi_reduction <maximumf>, %89, %cst_33 [1] : vector<8x128xf32> to vector<8xf32>
    %92 = vector.shape_cast %91 : vector<8xf32> to vector<8x1xf32>
    %93 = vector.broadcast %92 : vector<8x1xf32> to vector<8x128xf32>
    %94 = arith.subf %89, %93 : vector<8x128xf32>
    %95 = math.exp %94 : vector<8x128xf32>
    %cst_34 = arith.constant dense<0.000000e+00> : vector<8xf32>
    %96 = vector.multi_reduction <add>, %95, %cst_34 [1] : vector<8x128xf32> to vector<8xf32>
    %97 = vector.shape_cast %96 : vector<8xf32> to vector<8x1xf32>
    %98 = math.log %97 : vector<8x1xf32>
    %99 = arith.addf %98, %92 : vector<8x1xf32>
    %100 = tpu.iota {dimensions = array<i32: 1>} : vector<8x128xi32>
    %101 = vector.broadcast %90 : vector<8x1xi32> to vector<8x128xi32>
    %102 = arith.cmpi eq, %100, %101 : vector<8x128xi32>
    %103 = arith.extui %102 : vector<8x128xi1> to vector<8x128xi32>
    %104 = arith.sitofp %103 : vector<8x128xi32> to vector<8x128xf32>
    %105 = arith.mulf %104, %89 : vector<8x128xf32>
    %cst_35 = arith.constant dense<0.000000e+00> : vector<8xf32>
    %106 = vector.multi_reduction <add>, %105, %cst_35 [1] : vector<8x128xf32> to vector<8xf32>
    %107 = vector.shape_cast %106 : vector<8xf32> to vector<8x1xf32>
    %108 = arith.subf %99, %107 : vector<8x1xf32>
    %cst_36 = arith.constant 0.000000e+00 : f32
    %109 = vector.broadcast %cst_36 : f32 to vector<8x1xf32>
    %110 = arith.select %5, %108, %109 : vector<8x1xi1>, vector<8x1xf32>
    %111 = vector.shape_cast %110 : vector<8x1xf32> to vector<1x8x1xf32>
    %cst_37 = arith.constant dense<0.000000e+00> : vector<1xf32>
    %112 = vector.multi_reduction <add>, %111, %cst_37 [1, 2] : vector<1x8x1xf32> to vector<1xf32>
    %113 = vector.shape_cast %112 : vector<1xf32> to vector<1x1x1xf32>
    %114 = vector.extract %113[0, 0, 0] : f32 from vector<1x1x1xf32>
    %cst_38 = arith.constant 0.0909090936 : f32
    %115 = arith.mulf %cst_38, %114 : f32
    %116 = arith.addf %88, %115 : f32
    %cst_39 = arith.constant 1.250000e-01 : f32
    %117 = arith.mulf %116, %cst_39 : f32
    %118 = tpu.iota {dimensions = array<i32: 1>} : vector<1x8x128xi32>
    %119 = tpu.iota {dimensions = array<i32: 2>} : vector<1x8x128xi32>
    %c0_i32 = arith.constant 0 : i32
    %120 = vector.broadcast %c0_i32 : i32 to vector<1x8x128xi32>
    %121 = arith.cmpi eq, %118, %120 : vector<1x8x128xi32>
    %c0_i32_40 = arith.constant 0 : i32
    %122 = vector.broadcast %c0_i32_40 : i32 to vector<1x8x128xi32>
    %123 = arith.cmpi eq, %119, %122 : vector<1x8x128xi32>
    %124 = arith.andi %121, %123 : vector<1x8x128xi1>
    %cst_41 = arith.constant 0.000000e+00 : f32
    %125 = vector.broadcast %117 : f32 to vector<1x8x128xf32>
    %126 = vector.broadcast %cst_41 : f32 to vector<1x8x128xf32>
    %127 = arith.select %124, %125, %126 : vector<1x8x128xi1>, vector<1x8x128xf32>
    %c0_42 = arith.constant 0 : index
    %c0_43 = arith.constant 0 : index
    %c0_44 = arith.constant 0 : index
    %128 = vector.load %arg9[%c0_42, %c0_43, %c0_44] : memref<1x8x128xf32, #tpu.memory_space<vmem>>, vector<1x8x128xf32>
    tpu.vector_store %arg9[%c0_42, %c0_43, %c0_44], %127 {strides = array<i32>} : memref<1x8x128xf32, #tpu.memory_space<vmem>>, vector<1x8x128xf32>,
    return
  }
  func.func @transform_0(%arg0: i32) -> (i32, i32) {
    %c0_i32 = arith.constant 0 : i32
    %c0_i32_0 = arith.constant 0 : i32
    return %arg0, %c0_i32 : i32, i32
  }
  func.func @transform_1(%arg0: i32) -> (i32, i32) {
    %c0_i32 = arith.constant 0 : i32
    %c0_i32_0 = arith.constant 0 : i32
    return %arg0, %c0_i32 : i32, i32
  }
  func.func @transform_2(%arg0: i32) -> (i32, i32) {
    %c0_i32 = arith.constant 0 : i32
    %c0_i32_0 = arith.constant 0 : i32
    return %arg0, %c0_i32 : i32, i32
  }
  func.func @transform_3(%arg0: i32) -> (i32, i32) {
    %c0_i32 = arith.constant 0 : i32
    %c0_i32_0 = arith.constant 0 : i32
    return %arg0, %c0_i32 : i32, i32
  }
  func.func @transform_4(%arg0: i32) -> (i32, i32) {
    %c0_i32 = arith.constant 0 : i32
    %c0_i32_0 = arith.constant 0 : i32
    return %arg0, %c0_i32 : i32, i32
  }
  func.func @transform_5(%arg0: i32) -> (i32, i32) {
    %c0_i32 = arith.constant 0 : i32
    %c0_i32_0 = arith.constant 0 : i32
    return %arg0, %c0_i32 : i32, i32
  }
  func.func @transform_6(%arg0: i32) -> (i32, i32) {
    %c0_i32 = arith.constant 0 : i32
    %c0_i32_0 = arith.constant 0 : i32
    return %arg0, %c0_i32 : i32, i32
  }
  func.func @transform_7(%arg0: i32) -> (i32, i32) {
    %c0_i32 = arith.constant 0 : i32
    %c0_i32_0 = arith.constant 0 : i32
    return %arg0, %c0_i32 : i32, i32
  }
  func.func @transform_8(%arg0: i32) -> (i32, i32, i32) {
    %c0_i32 = arith.constant 0 : i32
    %c0_i32_0 = arith.constant 0 : i32
    %c0_i32_1 = arith.constant 0 : i32
    return %arg0, %c0_i32, %c0_i32_0 : i32, i32, i32
  }
}

</mosaic_0001>

<llo_original>
// kernel: _quatre_cross_entropy.1
$region0: #{_quatre_cross_entropy.1}
  #allocation0 [shape = 'u32[]', space=smem, size = 0x4, offset = 0x4, fixed_abs, tag = 'smem constant byte address 0x4 - core index']
  #allocation1 [shape = 'u32[144,128]{1,0:T(1,128)}', space=vmem, size = 0x12000, scoped, tag = 'internal scratch']
  %s0 = inlined_call_operand.vmem [shape: f32[8,128], index: 0, kind: input, shape index: {}]
  %s1 = inlined_call_operand.vmem [shape: s32[8,1], index: 1, kind: input, shape index: {}]
  %s2 = inlined_call_operand.vmem [shape: f32[8,128], index: 2, kind: input, shape index: {}]
  %s3 = inlined_call_operand.vmem [shape: s32[8,1], index: 3, kind: input, shape index: {}]
  %s4 = inlined_call_operand.vmem [shape: f32[8,128], index: 4, kind: input, shape index: {}]
  %s5 = inlined_call_operand.vmem [shape: s32[8,1], index: 5, kind: input, shape index: {}]
  %s6 = inlined_call_operand.vmem [shape: f32[8,128], index: 6, kind: input, shape index: {}]
  %s7 = inlined_call_operand.vmem [shape: s32[8,1], index: 7, kind: input, shape index: {}]
  %s8 = inlined_call_operand.vmem [shape: f32[1,8,128], index: 8, kind: output, shape index: {}]
  %s9 = sld [smem:[#allocation0]]
  $region42: #{_quatre_cross_entropy.1} parent=0
    _
  %s11 = ssub.s32 1, %s9
  %s12 = scalar_select 0, %s11, %s9
  // Predicated region
  $region2: #{_quatre_cross_entropy.1} parent=0 // pred_check
    _
  $region3: #{_quatre_cross_entropy.1} parent=0 // pred_check_branch
    %14 = sbr.rel (0) target = $region5
  $region4: #{_quatre_cross_entropy.1} parent=0 // pred_region
    _
  $region5: #{_quatre_cross_entropy.1} parent=0 // pred_fallthru
    _
  // Predicated region
  $region6: #{_quatre_cross_entropy.1} parent=0 // pred_check
    _
  $region7: #{_quatre_cross_entropy.1} parent=0 // pred_check_branch
    %16 = sbr.rel (0) target = $region9
  $region8: #{_quatre_cross_entropy.1} parent=0 // pred_region
    _
  $region9: #{_quatre_cross_entropy.1} parent=0 // pred_fallthru
    _
  // Predicated region
  $region10: #{_quatre_cross_entropy.1} parent=0 // pred_check
    _
  $region11: #{_quatre_cross_entropy.1} parent=0 // pred_check_branch
    %18 = sbr.rel (0) target = $region13
  $region12: #{_quatre_cross_entropy.1} parent=0 // pred_region
    _
  $region13: #{_quatre_cross_entropy.1} parent=0 // pred_fallthru
    _
  // Predicated region
  $region14: #{_quatre_cross_entropy.1} parent=0 // pred_check
    _
  $region15: #{_quatre_cross_entropy.1} parent=0 // pred_check_branch
    %20 = sbr.rel (0) target = $region17
  $region16: #{_quatre_cross_entropy.1} parent=0 // pred_region
    _
  $region17: #{_quatre_cross_entropy.1} parent=0 // pred_fallthru
    _
  // Predicated region
  $region18: #{_quatre_cross_entropy.1} parent=0 // pred_check
    _
  $region19: #{_quatre_cross_entropy.1} parent=0 // pred_check_branch
    %22 = sbr.rel (0) target = $region21
  $region20: #{_quatre_cross_entropy.1} parent=0 // pred_region
    _
  $region21: #{_quatre_cross_entropy.1} parent=0 // pred_fallthru
    _
  // Predicated region
  $region22: #{_quatre_cross_entropy.1} parent=0 // pred_check
    _
  $region23: #{_quatre_cross_entropy.1} parent=0 // pred_check_branch
    %24 = sbr.rel (0) target = $region25
  $region24: #{_quatre_cross_entropy.1} parent=0 // pred_region
    _
  $region25: #{_quatre_cross_entropy.1} parent=0 // pred_fallthru
    _
  // Predicated region
  $region26: #{_quatre_cross_entropy.1} parent=0 // pred_check
    _
  $region27: #{_quatre_cross_entropy.1} parent=0 // pred_check_branch
    %26 = sbr.rel (0) target = $region29
  $region28: #{_quatre_cross_entropy.1} parent=0 // pred_region
    _
  $region29: #{_quatre_cross_entropy.1} parent=0 // pred_fallthru
    _
  // Predicated region
  $region30: #{_quatre_cross_entropy.1} parent=0 // pred_check
    _
  $region31: #{_quatre_cross_entropy.1} parent=0 // pred_check_branch
    %28 = sbr.rel (0) target = $region33
  $region32: #{_quatre_cross_entropy.1} parent=0 // pred_region
    _
  $region33: #{_quatre_cross_entropy.1} parent=0 // pred_fallthru
    _
  %s29 = smul.u32 0, 8
  %v30 = vlaneseq
  %v31 = vshrl.u32 %v30, 7
  %v32 = vstv %s29
  %v33 = vadd.s32 %v31, %v32
  %vm34 = vcmp.lt.s32.totalorder %v33, 8
  %v35 = vld [vmem:[%s0] sm:$0xff]
  %v36 = vld [vmem:[%s1] sm:$0xff]
  %37 = vmax.xlane.f32.xlu0 %v35
  %v38 = vpop.xlane.xlu0 %37
  %v39 = vsub.f32 %v35, %v38
  %v40 = vmul.f32 %v39, 1.442695
  %v41 = vpow.pop %v40
  %42 = vadd.xlane.f32.xlu0 %v41
  %v43 = vpop.xlane.xlu0 %42
  %v44 = vlog2.pop %v43
  %v45 = vmul.f32 %v44, 0.6931472
  %v46 = vadd.f32 %v45, %v38
  %v47 = vlaneseq
  %v48 = vand.u32 %v47, 127
  %49 = vset.pattern.permute.xlu0 0
  %50 = vperm.xlu0 %49, %v36
  %v51 = vpop.permute.xlu0 %50
  %vm52 = vcmp.eq.s32.totalorder %v48, %v51
  %v53 = vsel %vm52, 1, 0
  %v54 = vcvt.s32.f32 %v53
  %v55 = vmul.f32 %v54, %v35
  %56 = vadd.xlane.f32.xlu0 %v55
  %v57 = vpop.xlane.xlu0 %56
  %v58 = vsub.f32 %v46, %v57
  %v59 = vsel %vm34, %v58, 0.0
  %vm60 = vcmask 7168
  %v61 = vsel %vm60, %v59, 0.0
  %62 = vadd.xlane.f32.xlu0 %v61
  %v63 = vpop.xlane.xlu0 %62
  %v64 = vrot.slane %v63, 4
  %v65 = vadd.f32 %v63, %v64
  %v66 = vrot.slane %v65, 2
  %v67 = vadd.f32 %v65, %v66
  %v68 = vrot.slane %v67, 1
  %v69 = vadd.f32 %v67, %v68
  %s70 = vtos %v69
  %s71 = smul.f32 %s70, 0.45454547
  %v72 = vld [vmem:[%s2] sm:$0xff]
  %v73 = vld [vmem:[%s3] sm:$0xff]
  %74 = vmax.xlane.f32.xlu0 %v72
  %v75 = vpop.xlane.xlu0 %74
  %v76 = vsub.f32 %v72, %v75
  %v77 = vmul.f32 %v76, 1.442695
  %v78 = vpow.pop %v77
  %79 = vadd.xlane.f32.xlu0 %v78
  %v80 = vpop.xlane.xlu0 %79
  %v81 = vlog2.pop %v80
  %v82 = vmul.f32 %v81, 0.6931472
  %v83 = vadd.f32 %v82, %v75
  %84 = vset.pattern.permute.xlu0 0
  %85 = vperm.xlu0 %84, %v73
  %v86 = vpop.permute.xlu0 %85
  %vm87 = vcmp.eq.s32.totalorder %v48, %v86
  %v88 = vsel %vm87, 1, 0
  %v89 = vcvt.s32.f32 %v88
  %v90 = vmul.f32 %v89, %v72
  %91 = vadd.xlane.f32.xlu0 %v90
  %v92 = vpop.xlane.xlu0 %91
  %v93 = vsub.f32 %v83, %v92
  %v94 = vsel %vm34, %v93, 0.0
  %v95 = vsel %vm60, %v94, 0.0
  %96 = vadd.xlane.f32.xlu0 %v95
  %v97 = vpop.xlane.xlu0 %96
  %v98 = vrot.slane %v97, 4
  %v99 = vadd.f32 %v97, %v98
  %v100 = vrot.slane %v99, 2
  %v101 = vadd.f32 %v99, %v100
  %v102 = vrot.slane %v101, 1
  %v103 = vadd.f32 %v101, %v102
  %s104 = vtos %v103
  %s105 = smul.f32 %s104, 0.22727273
  %s106 = sadd.f32 %s71, %s105
  %v107 = vld [vmem:[%s4] sm:$0xff]
  %v108 = vld [vmem:[%s5] sm:$0xff]
  %109 = vmax.xlane.f32.xlu0 %v107
  %v110 = vpop.xlane.xlu0 %109
  %v111 = vsub.f32 %v107, %v110
  %v112 = vmul.f32 %v111, 1.442695
  %v113 = vpow.pop %v112
  %114 = vadd.xlane.f32.xlu0 %v113
  %v115 = vpop.xlane.xlu0 %114
  %v116 = vlog2.pop %v115
  %v117 = vmul.f32 %v116, 0.6931472
  %v118 = vadd.f32 %v117, %v110
  %119 = vset.pattern.permute.xlu0 0
  %120 = vperm.xlu0 %119, %v108
  %v121 = vpop.permute.xlu0 %120
  %vm122 = vcmp.eq.s32.totalorder %v48, %v121
  %v123 = vsel %vm122, 1, 0
  %v124 = vcvt.s32.f32 %v123
  %v125 = vmul.f32 %v124, %v107
  %126 = vadd.xlane.f32.xlu0 %v125
  %v127 = vpop.xlane.xlu0 %126
  %v128 = vsub.f32 %v118, %v127
  %v129 = vsel %vm34, %v128, 0.0
  %v130 = vsel %vm60, %v129, 0.0
  %131 = vadd.xlane.f32.xlu0 %v130
  %v132 = vpop.xlane.xlu0 %131
  %v133 = vrot.slane %v132, 4
  %v134 = vadd.f32 %v132, %v133
  %v135 = vrot.slane %v134, 2
  %v136 = vadd.f32 %v134, %v135
  %v137 = vrot.slane %v136, 1
  %v138 = vadd.f32 %v136, %v137
  %s139 = vtos %v138
  %s140 = smul.f32 %s139, 0.22727273
  %s141 = sadd.f32 %s106, %s140
  %v142 = vld [vmem:[%s6] sm:$0xff]
  %v143 = vld [vmem:[%s7] sm:$0xff]
  %144 = vmax.xlane.f32.xlu0 %v142
  %v145 = vpop.xlane.xlu0 %144
  %v146 = vsub.f32 %v142, %v145
  %v147 = vmul.f32 %v146, 1.442695
  %v148 = vpow.pop %v147
  %149 = vadd.xlane.f32.xlu0 %v148
  %v150 = vpop.xlane.xlu0 %149
  %v151 = vlog2.pop %v150
  %v152 = vmul.f32 %v151, 0.6931472
  %v153 = vadd.f32 %v152, %v145
  %154 = vset.pattern.permute.xlu0 0
  %155 = vperm.xlu0 %154, %v143
  %v156 = vpop.permute.xlu0 %155
  %vm157 = vcmp.eq.s32.totalorder %v48, %v156
  %v158 = vsel %vm157, 1, 0
  %v159 = vcvt.s32.f32 %v158
  %v160 = vmul.f32 %v159, %v142
  %161 = vadd.xlane.f32.xlu0 %v160
  %v162 = vpop.xlane.xlu0 %161
  %v163 = vsub.f32 %v153, %v162
  %v164 = vsel %vm34, %v163, 0.0
  %v165 = vsel %vm60, %v164, 0.0
  %166 = vadd.xlane.f32.xlu0 %v165
  %v167 = vpop.xlane.xlu0 %166
  %v168 = vrot.slane %v167, 4
  %v169 = vadd.f32 %v167, %v168
  %v170 = vrot.slane %v169, 2
  %v171 = vadd.f32 %v169, %v170
  %v172 = vrot.slane %v171, 1
  %v173 = vadd.f32 %v171, %v172
  %s174 = vtos %v173
  %s175 = smul.f32 %s174, 0.09090909
  %s176 = sadd.f32 %s141, %s175
  %s177 = smul.f32 %s176, 0.125
  %vm178 = vcmp.eq.s32.totalorder %v31, 0
  %vm179 = vcmp.eq.s32.totalorder %v48, 0
  %vm180 = vmand %vm178, %vm179
  %v181 = vstv %s177
  %v182 = vsel %vm180, %v181, 0.0
  %183 = vst [vmem:[%s8] sm:$0xff] %v182
  // Predicated region
  $region34: #{_quatre_cross_entropy.1} parent=0 // pred_check
    _
  $region35: #{_quatre_cross_entropy.1} parent=0 // pred_check_branch
    %185 = sbr.rel (0) target = $region37
  $region36: #{_quatre_cross_entropy.1} parent=0 // pred_region
    _
  $region37: #{_quatre_cross_entropy.1} parent=0 // pred_fallthru
    _
  // Predicated region
  $region38: #{_quatre_cross_entropy.1} parent=0 // pred_check
    _
  $region39: #{_quatre_cross_entropy.1} parent=0 // pred_check_branch
    %187 = sbr.rel (0) target = $region41
  $region40: #{_quatre_cross_entropy.1} parent=0 // pred_region
    _
  $region41: #{_quatre_cross_entropy.1} parent=0 // pred_fallthru
    _

</llo_original>
